<compile_context>
chip_gen: v5e
topology: v5e:2x2
jax: 0.10.0
libtpu: 0.0.40
codegen_flags: <defaults>
</compile_context>

<pallas_src>
import functools
import math

import jax
import jax.numpy as jnp
from jax.experimental import pallas as pl
from jax.experimental.pallas import tpu as pltpu

BN_EPS = 1e-5


# --------------------------------------------------------------------------
# Fused SE kernel: mean -> fc1(+BN)+act -> fc2(+BN) -> sigmoid -> gate multiply
# --------------------------------------------------------------------------
def _se_fused_kernel(x_ref, w1_ref, b1_ref, w2_ref, b2_ref, o_ref, *, act, inv_hw):
    # x_ref: (Bt, C, HW) NCHW-native block; channels on sublanes, spatial on lanes.
    # Upcast immediately after load (v5e has no bf16 VPU); all math stays f32.
    x = x_ref[...].astype(jnp.float32)

    # Squeeze: global spatial mean along the lane axis -> (Bt, C)
    se = jnp.sum(x, axis=-1) * inv_hw

    # Reduce 1x1 conv (+ folded BN) + activation -> (Bt, C_red)
    r = jnp.dot(se, w1_ref[...], preferred_element_type=jnp.float32) + b1_ref[...]
    if act == "swish":
        r = r * jax.nn.sigmoid(r)
    elif act == "relu":
        r = jnp.maximum(r, 0.0)

    # Expand 1x1 conv (+ folded BN) + sigmoid gate -> (Bt, C)
    g = jax.nn.sigmoid(
        jnp.dot(r, w2_ref[...], preferred_element_type=jnp.float32) + b2_ref[...]
    )

    # Excite: lane-broadcast gating multiply; single lane-dense store of the block.
    o_ref[...] = (x * g[:, :, None]).astype(o_ref.dtype)


def _pick_bt(b, c, hw, itemsize, max_block_bytes=2 << 20):
    """Largest Bt that (a) keeps the per-step block <= ~2 MiB (v5e-safe with
    double buffering) and (b) leaves >= 2 grid steps so both v7x TCs get work."""
    per_elem = c * hw * itemsize
    bt = max(1, min(b, max_block_bytes // max(per_elem, 1)))
    while b % bt:
        bt -= 1
    if b >= 2 and b // bt < 2:
        bt = max(1, b // 2)
        while b % bt:
            bt -= 1
    return bt


@functools.partial(jax.jit, static_argnames=("swish",))
def squeeze_excitation(x_nchw, params, *, swish):
    """Pallas forward of SqueezeExcitation.  x_nchw: (B, C, H, W) like PyTorch.

    HBM I/O dtype follows x_nchw.dtype (pass bf16 activations to halve traffic);
    compute is always f32 inside the kernel.
    """
    b, c, h, w = x_nchw.shape
    hw = h * w
    act = "swish" if swish else "relu"
    io_dtype = x_nchw.dtype
    itemsize = jnp.dtype(io_dtype).itemsize

    # (B, C, H, W) -> (B, C, H*W): a pure reshape, no transpose / data movement.
    x = x_nchw.reshape(b, c, hw)

    w1, b1 = params["w1"], params["b1"]          # (C, C_red), (1, C_red)  BN-folded
    w2, b2 = params["w2"], params["b2"]          # (C_red, C), (1, C)      BN-folded
    c_red = w1.shape[1]

    bt = _pick_bt(b, c, hw, itemsize)
    grid = (b // bt,)

    cost = pl.CostEstimate(
        flops=int(b * (2 * c * c_red + 2 * c_red * c) + 2 * b * c * hw),
        transcendentals=int(b * (c + 2 * c_red)),
        bytes_accessed=int(2 * b * c * hw * itemsize
                           + 4 * (w1.size + w2.size + b1.size + b2.size)),
    )

    out = pl.pallas_call(
        functools.partial(_se_fused_kernel, act=act, inv_hw=1.0 / hw),
        out_shape=jax.ShapeDtypeStruct((b, c, hw), io_dtype),
        grid=grid,
        in_specs=[
            pl.BlockSpec((bt, c, hw), lambda i: (i, 0, 0)),     # activation slab
            pl.BlockSpec((c, c_red), lambda i: (0, 0)),         # reduce weight
            pl.BlockSpec((1, c_red), lambda i: (0, 0)),         # reduce bias
            pl.BlockSpec((c_red, c), lambda i: (0, 0)),         # expand weight
            pl.BlockSpec((1, c), lambda i: (0, 0)),             # expand bias
        ],
        out_specs=pl.BlockSpec((bt, c, hw), lambda i: (i, 0, 0)),
        input_output_aliases={0: 0},                            # in-place gating
        compiler_params=pltpu.CompilerParams(
            dimension_semantics=("parallel",),
        ),
        cost_estimate=cost,
    )(x, w1, b1, w2, b2)

    return out.reshape(b, c, h, w)


# --------------------------------------------------------------------------
# Parameters (1x1 convs with bias; BatchNorm affine folded in ahead of time)
# --------------------------------------------------------------------------
def _bn_fold(w, b, gamma, beta, mean, var):
    scale = gamma / jnp.sqrt(var + BN_EPS)
    shift = beta - mean * scale
    return w * scale[None, :], b * scale + shift


def make_se_params(key, c_in, c_red):
    k1, k2, k3, k4 = jax.random.split(key, 4)
    std1 = math.sqrt(2.0 / (1 * 1 * c_red))
    w1 = std1 * jax.random.normal(k1, (c_in, c_red), jnp.float32)
    b1 = 0.01 * jax.random.normal(k2, (c_red,), jnp.float32)
    std2 = math.sqrt(2.0 / (1 * 1 * c_in))
    w2 = std2 * jax.random.normal(k3, (c_red, c_in), jnp.float32)
    b2 = 0.01 * jax.random.normal(k4, (c_in,), jnp.float32)

    # Inference-mode BatchNorm (identity running stats), folded into conv params.
    ones_r, zeros_r = jnp.ones((c_red,), jnp.float32), jnp.zeros((c_red,), jnp.float32)
    ones_c, zeros_c = jnp.ones((c_in,), jnp.float32), jnp.zeros((c_in,), jnp.float32)
    w1f, b1f = _bn_fold(w1, b1, ones_r, zeros_r, zeros_r, ones_r)
    w2f, b2f = _bn_fold(w2, b2, ones_c, zeros_c, zeros_c, ones_c)

    return dict(
        w1=w1f, b1=b1f.reshape(1, c_red),
        w2=w2f, b2=b2f.reshape(1, c_in),
    )


# --------------------------------------------------------------------------
# Pure-JAX reference (same folded params) for correctness checking
# --------------------------------------------------------------------------
def se_reference(x_nchw, params, swish):
    x = x_nchw.astype(jnp.float32)
    se = jnp.mean(x, axis=(2, 3))                               # (B, C)
    r = se @ params["w1"] + params["b1"]
    r = r * jax.nn.sigmoid(r) if swish else jnp.maximum(r, 0.0)
    g = jax.nn.sigmoid(r @ params["w2"] + params["b2"])         # (B, C)
    return x * g[:, :, None, None]


# --------------------------------------------------------------------------
# main
# --------------------------------------------------------------------------
if __name__ == "__main__":
    key = jax.random.PRNGKey(0)
    x_key, p_key = jax.random.split(key)

    B, C, H, W = 2, 64, 16, 16        # small, consistent with the module
    C_RED = 16                        # SE reduction channels (se_ratio = 0.25)
    SWISH = True

    params = make_se_params(p_key, C, C_RED)
    # Activations carried in bf16 through HBM (kernel upcasts to f32 internally).
    x = jax.random.normal(x_key, (B, C, H, W), jnp.float32).astype(jnp.bfloat16)

    out = squeeze_excitation(x, params, swish=SWISH)
    out = jax.block_until_ready(out)

    ref = se_reference(x, params, SWISH)
    assert out.shape == x.shape and out.dtype == x.dtype, (out.shape, out.dtype)
    out_f32 = out.astype(jnp.float32)
    assert bool(jnp.all(jnp.isfinite(out_f32)))
    err = float(jnp.max(jnp.abs(out_f32 - ref)))
    assert err < 3e-2, err            # bf16 output rounding bound
    print("KERNEL_OK")
</pallas_src>

<mosaic_0001>
module attributes {stable_mosaic.version = 11 : i64} {
  func.func @_se_fused_kernel(%arg0: i32, %arg1: memref<1x64x256xbf16, #tpu.memory_space<vmem>>, %arg2: memref<64x16xf32, #tpu.memory_space<vmem>>, %arg3: memref<1x16xf32, #tpu.memory_space<vmem>>, %arg4: memref<16x64xf32, #tpu.memory_space<vmem>>, %arg5: memref<1x64xf32, #tpu.memory_space<vmem>>, %arg6: memref<1x64x256xbf16, #tpu.memory_space<vmem>>) attributes {dimension_semantics = [#tpu.dimension_semantics<parallel>], iteration_bounds = array<i64: 2>, scalar_prefetch = 0 : i64, scratch_operands = 0 : i64, tpu.core_type = #tpu.core_type<tc>, window_params = [{transform_indices = @transform_0, window_bounds = array<i64: 1, 64, 256>}, {pipeline_mode = #tpu.pipeline_mode<synchronous>, transform_indices = @transform_1, window_bounds = array<i64: 64, 16>}, {pipeline_mode = #tpu.pipeline_mode<synchronous>, transform_indices = @transform_2, window_bounds = array<i64: 1, 16>}, {pipeline_mode = #tpu.pipeline_mode<synchronous>, transform_indices = @transform_3, window_bounds = array<i64: 16, 64>}, {pipeline_mode = #tpu.pipeline_mode<synchronous>, transform_indices = @transform_4, window_bounds = array<i64: 1, 64>}, {transform_indices = @transform_5, window_bounds = array<i64: 1, 64, 256>}]} {
    %c0 = arith.constant 0 : index
    %c0_0 = arith.constant 0 : index
    %c0_1 = arith.constant 0 : index
    %0 = vector.load %arg1[%c0, %c0_0, %c0_1] : memref<1x64x256xbf16, #tpu.memory_space<vmem>>, vector<1x64x256xbf16>
    %1 = arith.extf %0 : vector<1x64x256xbf16> to vector<1x64x256xf32>
    %cst = arith.constant dense<0.000000e+00> : vector<1x64xf32>
    %2 = vector.multi_reduction <add>, %1, %cst [2] : vector<1x64x256xf32> to vector<1x64xf32>
    %cst_2 = arith.constant 3.906250e-03 : f32
    %3 = vector.broadcast %cst_2 : f32 to vector<1x64xf32>
    %4 = arith.mulf %2, %3 : vector<1x64xf32>
    %c0_3 = arith.constant 0 : index
    %c0_4 = arith.constant 0 : index
    %5 = vector.load %arg2[%c0_3, %c0_4] : memref<64x16xf32, #tpu.memory_space<vmem>>, vector<64x16xf32>
    %cst_5 = arith.constant dense<0.000000e+00> : vector<1x16xf32>
    %6 = tpu.matmul %4, %5, %cst_5 {dimension_numbers = #tpu.dot_dimension_numbers<[1], [0], [0], [1], [0, 0, 1, 1], [], []>} : vector<1x64xf32>, vector<64x16xf32>, vector<1x16xf32> -> vector<1x16xf32>
    %c0_6 = arith.constant 0 : index
    %c0_7 = arith.constant 0 : index
    %7 = vector.load %arg3[%c0_6, %c0_7] : memref<1x16xf32, #tpu.memory_space<vmem>>, vector<1x16xf32>
    %8 = arith.addf %6, %7 : vector<1x16xf32>
    %9 = arith.negf %8 : vector<1x16xf32>
    %10 = math.exp %9 : vector<1x16xf32>
    %cst_8 = arith.constant 1.000000e+00 : f32
    %11 = vector.broadcast %cst_8 : f32 to vector<1x16xf32>
    %12 = arith.addf %11, %10 : vector<1x16xf32>
    %13 = arith.divf %11, %12 : vector<1x16xf32>
    %14 = arith.mulf %8, %13 : vector<1x16xf32>
    %c0_9 = arith.constant 0 : index
    %c0_10 = arith.constant 0 : index
    %15 = vector.load %arg4[%c0_9, %c0_10] : memref<16x64xf32, #tpu.memory_space<vmem>>, vector<16x64xf32>
    %cst_11 = arith.constant dense<0.000000e+00> : vector<1x64xf32>
    %16 = tpu.matmul %14, %15, %cst_11 {dimension_numbers = #tpu.dot_dimension_numbers<[1], [0], [0], [1], [0, 0, 1, 1], [], []>} : vector<1x16xf32>, vector<16x64xf32>, vector<1x64xf32> -> vector<1x64xf32>
    %c0_12 = arith.constant 0 : index
    %c0_13 = arith.constant 0 : index
    %17 = vector.load %arg5[%c0_12, %c0_13] : memref<1x64xf32, #tpu.memory_space<vmem>>, vector<1x64xf32>
    %18 = arith.addf %16, %17 : vector<1x64xf32>
    %19 = arith.negf %18 : vector<1x64xf32>
    %20 = math.exp %19 : vector<1x64xf32>
    %cst_14 = arith.constant 1.000000e+00 : f32
    %21 = vector.broadcast %cst_14 : f32 to vector<1x64xf32>
    %22 = arith.addf %21, %20 : vector<1x64xf32>
    %23 = arith.divf %21, %22 : vector<1x64xf32>
    %24 = vector.shape_cast %23 : vector<1x64xf32> to vector<1x64x1xf32>
    %25 = vector.broadcast %24 : vector<1x64x1xf32> to vector<1x64x256xf32>
    %26 = arith.mulf %1, %25 : vector<1x64x256xf32>
    %27 = arith.truncf %26 : vector<1x64x256xf32> to vector<1x64x256xbf16>
    %c0_15 = arith.constant 0 : index
    %c0_16 = arith.constant 0 : index
    %c0_17 = arith.constant 0 : index
    %28 = vector.load %arg6[%c0_15, %c0_16, %c0_17] : memref<1x64x256xbf16, #tpu.memory_space<vmem>>, vector<1x64x256xbf16>
    tpu.vector_store %arg6[%c0_15, %c0_16, %c0_17], %27 {strides = array<i32>} : memref<1x64x256xbf16, #tpu.memory_space<vmem>>, vector<1x64x256xbf16>,
    return
  }
  func.func @transform_0(%arg0: i32) -> (i32, i32, i32) {
    %c0_i32 = arith.constant 0 : i32
    %c0_i32_0 = arith.constant 0 : i32
    %c0_i32_1 = arith.constant 0 : i32
    return %arg0, %c0_i32, %c0_i32_0 : i32, i32, i32
  }
  func.func @transform_1(%arg0: i32) -> (i32, i32) {
    %c0_i32 = arith.constant 0 : i32
    %c0_i32_0 = arith.constant 0 : i32
    %c0_i32_1 = arith.constant 0 : i32
    return %c0_i32, %c0_i32_0 : i32, i32
  }
  func.func @transform_2(%arg0: i32) -> (i32, i32) {
    %c0_i32 = arith.constant 0 : i32
    %c0_i32_0 = arith.constant 0 : i32
    %c0_i32_1 = arith.constant 0 : i32
    return %c0_i32, %c0_i32_0 : i32, i32
  }
  func.func @transform_3(%arg0: i32) -> (i32, i32) {
    %c0_i32 = arith.constant 0 : i32
    %c0_i32_0 = arith.constant 0 : i32
    %c0_i32_1 = arith.constant 0 : i32
    return %c0_i32, %c0_i32_0 : i32, i32
  }
  func.func @transform_4(%arg0: i32) -> (i32, i32) {
    %c0_i32 = arith.constant 0 : i32
    %c0_i32_0 = arith.constant 0 : i32
    %c0_i32_1 = arith.constant 0 : i32
    return %c0_i32, %c0_i32_0 : i32, i32
  }
  func.func @transform_5(%arg0: i32) -> (i32, i32, i32) {
    %c0_i32 = arith.constant 0 : i32
    %c0_i32_0 = arith.constant 0 : i32
    %c0_i32_1 = arith.constant 0 : i32
    return %arg0, %c0_i32, %c0_i32_0 : i32, i32, i32
  }
}

</mosaic_0001>

<llo_original>
// kernel: squeeze_excitation.1
$region0: #{squeeze_excitation.1}
  #allocation0 [shape = 'u32[]', space=smem, size = 0x4, offset = 0x4, fixed_abs, tag = 'smem constant byte address 0x4 - core index']
  #allocation1 [shape = 'u32[72,128]{1,0:T(1,128)}', space=vmem, size = 0x9000, scoped, tag = 'internal scratch']
  %s0 = inlined_call_operand.vmem [shape: bf16[2,64,256], index: 0, kind: input, shape index: {}, may-alias: {0,5}]
  %s1 = inlined_call_operand.vmem [shape: f32[64,16], index: 1, kind: input, shape index: {}]
  %s2 = inlined_call_operand.vmem [shape: f32[1,16], index: 2, kind: input, shape index: {}]
  %s3 = inlined_call_operand.vmem [shape: f32[16,64], index: 3, kind: input, shape index: {}]
  %s4 = inlined_call_operand.vmem [shape: f32[1,64], index: 4, kind: input, shape index: {}]
  %s5 = inlined_call_operand.vmem [shape: bf16[2,64,256], index: 5, kind: output, shape index: {}, may-alias: {0,5}]
  %s6 = sld [smem:[#allocation0]]
  $region53: #{squeeze_excitation.1} parent=0
    _
  %s8 = ssub.s32 1, %s6
  %s9 = scalar_select 0, %s8, %s6
  loop: start=0, step=1, limit=4
  $region2: #{squeeze_excitation.1} parent=0 // loop_pre_header
    _
  $region3: #{squeeze_excitation.1} parent=0 // loop_header
    %s11 = sphi 0, %s15
    %p12 = scmp.ge.s32.totalorder %s11, 4
    %s21 = sphi 0, %s23
    %s24 = sphi 0, %s21
    %s25 = sphi 0, %s24
    %s41 = sphi 0, %s25
    %s45 = sphi 0, %s45
    %s47 = sphi 0, %s45
    %s48 = sphi 0, %s47
    %s62 = sphi 0, %s48
    %s66 = sphi 0, %s66
    %s68 = sphi 0, %s66
    %s69 = sphi 0, %s68
    %s83 = sphi 0, %s69
    %s87 = sphi 0, %s87
    %s89 = sphi 0, %s87
    %s90 = sphi 0, %s89
    %s104 = sphi 0, %s90
    %s108 = sphi 0, %s108
    %s110 = sphi 0, %s108
    %s111 = sphi 0, %s110
    %s125 = sphi 0, %s111
    %s131 = sphi 0, %s133
    %s134 = sphi 0, %s131
    %s135 = sphi 0, %s134
    %s151 = sphi 0, %s135
  $region4: #{squeeze_excitation.1} parent=0 // loop_header_branch
    %14 = sbr.rel (%p12) target = $region8
  $region5: #{squeeze_excitation.1} parent=0 // loop_body
    %s16 = ssub.s32 %s11, 1
    %s17 = ssub.s32 %s11, 2
    %s18 = sadd.s32 %s11, 1
    %s19 = ssub.s32 %s11, %s18
    %p20 = scmp.eq.s32.totalorder %s19, 0
    %s22 = sadd.s32 %s21, 1
    %s23 = scalar_select %p20, %s21, %s22
    %p26 = pneg %p20
    %p27 = scmp.eq.s32.totalorder %s11, 1
    %p28 = por %p26, %p27
    %p29 = scmp.ne.s32.totalorder %s21, %s24
    %p30 = scmp.eq.s32.totalorder %s11, 0
    %p31 = por %p29, %p30
    %p32 = scmp.ne.s32.totalorder %s21, %s24
    %p33 = scmp.eq.s32.totalorder %s16, 1
    %p34 = por %p32, %p33
    %p35 = scmp.ne.s32.totalorder %s24, %s25
    %p36 = scmp.eq.s32.totalorder %s16, 0
    %p37 = por %p35, %p36
    %p38 = scmp.ne.s32.totalorder %s24, %s25
    %p39 = scmp.eq.s32.totalorder %s17, 1
    %p40 = por %p38, %p39
    %p42 = scmp.ne.s32.totalorder %s25, %s41
    %p43 = scmp.eq.s32.totalorder %s17, 0
    %p44 = por %p42, %p43
    %s46 = sadd.s32 %s45, 1
    %p49 = scmp.eq.s32.totalorder %s11, 1
    %p50 = scmp.ne.s32.totalorder %s45, %s47
    %p51 = scmp.eq.s32.totalorder %s11, 0
    %p52 = por %p50, %p51
    %p53 = scmp.ne.s32.totalorder %s45, %s47
    %p54 = scmp.eq.s32.totalorder %s16, 1
    %p55 = por %p53, %p54
    %p56 = scmp.ne.s32.totalorder %s47, %s48
    %p57 = scmp.eq.s32.totalorder %s16, 0
    %p58 = por %p56, %p57
    %p59 = scmp.ne.s32.totalorder %s47, %s48
    %p60 = scmp.eq.s32.totalorder %s17, 1
    %p61 = por %p59, %p60
    %p63 = scmp.ne.s32.totalorder %s48, %s62
    %p64 = scmp.eq.s32.totalorder %s17, 0
    %p65 = por %p63, %p64
    %s67 = sadd.s32 %s66, 1
    %p70 = scmp.eq.s32.totalorder %s11, 1
    %p71 = scmp.ne.s32.totalorder %s66, %s68
    %p72 = scmp.eq.s32.totalorder %s11, 0
    %p73 = por %p71, %p72
    %p74 = scmp.ne.s32.totalorder %s66, %s68
    %p75 = scmp.eq.s32.totalorder %s16, 1
    %p76 = por %p74, %p75
    %p77 = scmp.ne.s32.totalorder %s68, %s69
    %p78 = scmp.eq.s32.totalorder %s16, 0
    %p79 = por %p77, %p78
    %p80 = scmp.ne.s32.totalorder %s68, %s69
    %p81 = scmp.eq.s32.totalorder %s17, 1
    %p82 = por %p80, %p81
    %p84 = scmp.ne.s32.totalorder %s69, %s83
    %p85 = scmp.eq.s32.totalorder %s17, 0
    %p86 = por %p84, %p85
    %s88 = sadd.s32 %s87, 1
    %p91 = scmp.eq.s32.totalorder %s11, 1
    %p92 = scmp.ne.s32.totalorder %s87, %s89
    %p93 = scmp.eq.s32.totalorder %s11, 0
    %p94 = por %p92, %p93
    %p95 = scmp.ne.s32.totalorder %s87, %s89
    %p96 = scmp.eq.s32.totalorder %s16, 1
    %p97 = por %p95, %p96
    %p98 = scmp.ne.s32.totalorder %s89, %s90
    %p99 = scmp.eq.s32.totalorder %s16, 0
    %p100 = por %p98, %p99
    %p101 = scmp.ne.s32.totalorder %s89, %s90
    %p102 = scmp.eq.s32.totalorder %s17, 1
    %p103 = por %p101, %p102
    %p105 = scmp.ne.s32.totalorder %s90, %s104
    %p106 = scmp.eq.s32.totalorder %s17, 0
    %p107 = por %p105, %p106
    %s109 = sadd.s32 %s108, 1
    %p112 = scmp.eq.s32.totalorder %s11, 1
    %p113 = scmp.ne.s32.totalorder %s108, %s110
    %p114 = scmp.eq.s32.totalorder %s11, 0
    %p115 = por %p113, %p114
    %p116 = scmp.ne.s32.totalorder %s108, %s110
    %p117 = scmp.eq.s32.totalorder %s16, 1
    %p118 = por %p116, %p117
    %p119 = scmp.ne.s32.totalorder %s110, %s111
    %p120 = scmp.eq.s32.totalorder %s16, 0
    %p121 = por %p119, %p120
    %p122 = scmp.ne.s32.totalorder %s110, %s111
    %p123 = scmp.eq.s32.totalorder %s17, 1
    %p124 = por %p122, %p123
    %p126 = scmp.ne.s32.totalorder %s111, %s125
    %p127 = scmp.eq.s32.totalorder %s17, 0
    %p128 = por %p126, %p127
    %s129 = ssub.s32 %s11, %s18
    %p130 = scmp.eq.s32.totalorder %s129, 0
    %s132 = sadd.s32 %s131, 1
    %s133 = scalar_select %p130, %s131, %s132
    %p136 = pneg %p130
    %p137 = scmp.eq.s32.totalorder %s11, 1
    %p138 = por %p136, %p137
    %p139 = scmp.ne.s32.totalorder %s131, %s134
    %p140 = scmp.eq.s32.totalorder %s11, 0
    %p141 = por %p139, %p140
    %p142 = scmp.ne.s32.totalorder %s131, %s134
    %p143 = scmp.eq.s32.totalorder %s16, 1
    %p144 = por %p142, %p143
    %p145 = scmp.ne.s32.totalorder %s134, %s135
    %p146 = scmp.eq.s32.totalorder %s16, 0
    %p147 = por %p145, %p146
    %p148 = scmp.ne.s32.totalorder %s134, %s135
    %p149 = scmp.eq.s32.totalorder %s17, 1
    %p150 = por %p148, %p149
    %p152 = scmp.ne.s32.totalorder %s135, %s151
    %p153 = scmp.eq.s32.totalorder %s17, 0
    %p154 = por %p152, %p153
    %p155 = scmp.le.s32.totalorder 1, %s11
    %p156 = scmp.lt.s32.totalorder %s11, 3
    %p157 = pnand %p155, %p156
    %p158 = pneg %p157
    // Predicated region
    $region9: #{squeeze_excitation.1} parent=5 // pred_check
      _
    $region10: #{squeeze_excitation.1} parent=5 // pred_check_branch
      %160 = sbr.rel (%p157) target = $region12
    $region11: #{squeeze_excitation.1} parent=5 // pred_region
      %s161 = ssub.s32 %s11, 1
      // Predicated region
      $region13: #{squeeze_excitation.1} parent=11 // pred_check
        %p162 = pneg %p58
      $region14: #{squeeze_excitation.1} parent=11 // pred_check_branch
        %164 = sbr.rel (%p162) target = $region16
      $region15: #{squeeze_excitation.1} parent=11 // pred_region
        _
      $region16: #{squeeze_excitation.1} parent=11 // pred_fallthru
        _
      // Predicated region
      $region17: #{squeeze_excitation.1} parent=11 // pred_check
        %p165 = pneg %p79
      $region18: #{squeeze_excitation.1} parent=11 // pred_check_branch
        %167 = sbr.rel (%p165) target = $region20
      $region19: #{squeeze_excitation.1} parent=11 // pred_region
        _
      $region20: #{squeeze_excitation.1} parent=11 // pred_fallthru
        _
      // Predicated region
      $region21: #{squeeze_excitation.1} parent=11 // pred_check
        %p168 = pneg %p100
      $region22: #{squeeze_excitation.1} parent=11 // pred_check_branch
        %170 = sbr.rel (%p168) target = $region24
      $region23: #{squeeze_excitation.1} parent=11 // pred_region
        _
      $region24: #{squeeze_excitation.1} parent=11 // pred_fallthru
        _
      // Predicated region
      $region25: #{squeeze_excitation.1} parent=11 // pred_check
        %p171 = pneg %p121
      $region26: #{squeeze_excitation.1} parent=11 // pred_check_branch
        %173 = sbr.rel (%p171) target = $region28
      $region27: #{squeeze_excitation.1} parent=11 // pred_region
        _
      $region28: #{squeeze_excitation.1} parent=11 // pred_fallthru
        _
    $region12: #{squeeze_excitation.1} parent=5 // pred_fallthru
      _
    %p174 = scmp.lt.s32.totalorder %s11, 2
    // Predicated region
    $region29: #{squeeze_excitation.1} parent=5 // pred_check
      %p175 = pneg %p174
    $region30: #{squeeze_excitation.1} parent=5 // pred_check_branch
      %177 = sbr.rel (%p175) target = $region32
    $region31: #{squeeze_excitation.1} parent=5 // pred_region
      // Predicated region
      $region33: #{squeeze_excitation.1} parent=31 // pred_check
        %p178 = pneg %p31
      $region34: #{squeeze_excitation.1} parent=31 // pred_check_branch
        %180 = sbr.rel (%p178) target = $region36
      $region35: #{squeeze_excitation.1} parent=31 // pred_region
        %p181 = scmp.lt.s32.totalorder %s11, 1
        %s182 = scalar_select %p181, %s11, 1
        %s183 = smul.addr %s182, 16
        %s184 = smul.addr %s183, 4
        %s185 = scalar_lea.vmem %s0, %s184
      $region36: #{squeeze_excitation.1} parent=31 // pred_fallthru
        _
    $region32: #{squeeze_excitation.1} parent=5 // pred_fallthru
      _
    %p186 = scmp.le.s32.totalorder 1, %s11
    %p187 = scmp.lt.s32.totalorder %s11, 3
    %p188 = pnand %p186, %p187
    %p189 = pneg %p188
    // Predicated region
    $region37: #{squeeze_excitation.1} parent=5 // pred_check
      _
    $region38: #{squeeze_excitation.1} parent=5 // pred_check_branch
      %191 = sbr.rel (%p188) target = $region40
    $region39: #{squeeze_excitation.1} parent=5 // pred_region
      %s192 = ssub.s32 %s11, 1
      %p193 = scmp.lt.s32.totalorder %s16, 1
      %s194 = scalar_select %p193, %s16, 1
      %s195 = smul.addr %s194, 16
      %s196 = smul.addr %s195, 4
      %s197 = scalar_lea.vmem %s0, %s196
      %p198 = pneg %p37
      %p199 = pneg %p34
      %p200 = pneg %p58
      %p201 = pneg %p55
      %p202 = pneg %p79
      %p203 = pneg %p76
      %p204 = pneg %p100
      %p205 = pneg %p97
      %p206 = pneg %p121
      %p207 = pneg %p118
      %p208 = pneg %p147
      %p209 = pneg %p144
      %p210 = scmp.lt.s32.totalorder %s16, 1
      %s211 = scalar_select %p210, %s16, 1
      %s212 = smul.addr %s211, 16
      %s213 = smul.addr %s212, 4
      %s214 = scalar_lea.vmem %s5, %s213
      %p215 = scmp.lt.s32.totalorder %s16, 1
      %s216 = scalar_select %p215, %s16, 1
      %s217 = smul.addr %s216, 16
      %s218 = smul.addr %s217, 4
      %s219 = scalar_lea.vmem %s0, %s218
      %p220 = scmp.lt.s32.totalorder %s16, 1
      %s221 = scalar_select %p220, %s16, 1
      %s222 = smul.addr %s221, 16
      %s223 = smul.addr %s222, 4
      %s224 = scalar_lea.vmem %s5, %s223
      %v225 = vld [vmem:[%s219] sm:$0xff]
      %v226 = vld [vmem:[%s219 + $0x8] sm:$0xff]
      %v227 = vld [vmem:[%s219 + $0x10] sm:$0xff]
      %v228 = vld [vmem:[%s219 + $0x18] sm:$0xff]
      %v229 = vld [vmem:[%s219 + $0x20] sm:$0xff]
      %v230 = vld [vmem:[%s219 + $0x28] sm:$0xff]
      %v231 = vld [vmem:[%s219 + $0x30] sm:$0xff]
      %v232 = vld [vmem:[%s219 + $0x38] sm:$0xff]
      %v233 = vunpack.c.l.bf16 %v225
      %v234 = vunpack.c.h.bf16 %v225
      %v235 = vunpack.c.l.bf16 %v226
      %v236 = vunpack.c.h.bf16 %v226
      %v237 = vunpack.c.l.bf16 %v227
      %v238 = vunpack.c.h.bf16 %v227
      %v239 = vunpack.c.l.bf16 %v228
      %v240 = vunpack.c.h.bf16 %v228
      %v241 = vunpack.c.l.bf16 %v229
      %v242 = vunpack.c.h.bf16 %v229
      %v243 = vunpack.c.l.bf16 %v230
      %v244 = vunpack.c.h.bf16 %v230
      %v245 = vunpack.c.l.bf16 %v231
      %v246 = vunpack.c.h.bf16 %v231
      %v247 = vunpack.c.l.bf16 %v232
      %v248 = vunpack.c.h.bf16 %v232
      %v249 = vadd.f32 %v233, %v234
      %250 = vadd.xlane.f32.xlu0 %v249
      %v251 = vpop.xlane.xlu0 %250
      %v252 = vadd.f32 %v235, %v236
      %253 = vadd.xlane.f32.xlu0 %v252
      %v254 = vpop.xlane.xlu0 %253
      %v255 = vadd.f32 %v237, %v238
      %256 = vadd.xlane.f32.xlu0 %v255
      %v257 = vpop.xlane.xlu0 %256
      %v258 = vadd.f32 %v239, %v240
      %259 = vadd.xlane.f32.xlu0 %v258
      %v260 = vpop.xlane.xlu0 %259
      %v261 = vadd.f32 %v241, %v242
      %262 = vadd.xlane.f32.xlu0 %v261
      %v263 = vpop.xlane.xlu0 %262
      %v264 = vadd.f32 %v243, %v244
      %265 = vadd.xlane.f32.xlu0 %v264
      %v266 = vpop.xlane.xlu0 %265
      %v267 = vadd.f32 %v245, %v246
      %268 = vadd.xlane.f32.xlu0 %v267
      %v269 = vpop.xlane.xlu0 %268
      %v270 = vadd.f32 %v247, %v248
      %271 = vadd.xlane.f32.xlu0 %v270
      %v272 = vpop.xlane.xlu0 %271
      %v273 = vmul.f32 %v251, 0.00390625
      %v274 = vmul.f32 %v254, 0.00390625
      %v275 = vmul.f32 %v257, 0.00390625
      %v276 = vmul.f32 %v260, 0.00390625
      %v277 = vmul.f32 %v263, 0.00390625
      %v278 = vmul.f32 %v266, 0.00390625
      %v279 = vmul.f32 %v269, 0.00390625
      %v280 = vmul.f32 %v272, 0.00390625
      %v281 = vld [vmem:[%s1] sm:$0xff]
      %v282 = vld [vmem:[%s1 + $0x8] sm:$0xff]
      %v283 = vld [vmem:[%s1 + $0x10] sm:$0xff]
      %v284 = vld [vmem:[%s1 + $0x18] sm:$0xff]
      %v285 = vld [vmem:[%s1 + $0x20] sm:$0xff]
      %v286 = vld [vmem:[%s1 + $0x28] sm:$0xff]
      %v287 = vld [vmem:[%s1 + $0x30] sm:$0xff]
      %v288 = vld [vmem:[%s1 + $0x38] sm:$0xff]
      %v289 = vld [vmem:[%s2] sm:$0x1]
      %v298 = vlaneseq
      %v299 = vand.u32 %v298, 127
      %v300 = vperm.slane %v273, %v299
      %v301 = vadd.s32 %v299, 4294967288
      %v302 = vperm.slane %v274, %v301
      %vm303 = vcmask 130112
      %v304 = vsel %vm303, %v302, %v300
      %v305 = vadd.s32 %v299, 4294967280
      %v306 = vperm.slane %v275, %v305
      %vm307 = vcmask 195712
      %v308 = vsel %vm307, %v306, %v304
      %v309 = vadd.s32 %v299, 4294967272
      %v310 = vperm.slane %v276, %v309
      %vm311 = vcmask 261312
      %v312 = vsel %vm311, %v310, %v308
      %v313 = vadd.s32 %v299, 4294967264
      %v314 = vperm.slane %v277, %v313
      %vm315 = vcmask 326912
      %v316 = vsel %vm315, %v314, %v312
      %v317 = vadd.s32 %v299, 4294967256
      %v318 = vperm.slane %v278, %v317
      %vm319 = vcmask 392512
      %v320 = vsel %vm319, %v318, %v316
      %v321 = vadd.s32 %v299, 4294967248
      %v322 = vperm.slane %v279, %v321
      %vm323 = vcmask 458112
      %v324 = vsel %vm323, %v322, %v320
      %v325 = vadd.s32 %v299, 4294967240
      %v326 = vperm.slane %v280, %v325
      %vm327 = vcmask 523712
      %v328 = vsel %vm327, %v326, %v324
      %vm329 = vcmask 523264
      %v330 = vsel %vm329, %v328, 0
      %332 = vmatpush.msra.mxu0 0.0
      %333 = vmatpush.msra.mxu0 0.0
      %334 = vmatpush.msra.mxu0 0.0
      %335 = vmatpush.msra.mxu0 0.0
      %336 = vmatpush.msra.mxu0 0.0
      %337 = vmatpush.msra.mxu0 0.0
      %338 = vmatpush.msra.mxu0 0.0
      %339 = vmatpush.msra.mxu0 0.0
      %340 = vmatpush.msra.mxu0 %v288
      %341 = vmatpush.msra.mxu0 %v287
      %342 = vmatpush.msra.mxu0 %v286
      %343 = vmatpush.msra.mxu0 %v285
      %344 = vmatpush.msra.mxu0 %v284
      %345 = vmatpush.msra.mxu0 %v283
      %346 = vmatpush.msra.mxu0 %v282
      %347 = vmatpush.msra.mxu0 %v281
      %348 = vmatmul.f32.gmra.mxu0 %v330
      %v349 = vpop.f32.mrf.mxu0
      %v350 = vadd.f32 %v289, %v349
      %351 = vdwg.mxu0
      %v352 = vxor.u32 %v350, 2147483648
      %v353 = vmul.f32 %v352, 1.442695
      %v354 = vpow.pop %v353
      %v355 = vadd.f32 %v354, 1.0
      %v356 = vrcp.pop %v355
      %v357 = vmul.f32 %v355, %v356
      %v358 = vsub.f32 1.0, %v357
      %v359 = vmul.f32 %v356, %v358
      %v360 = vadd.f32 %v356, %v359
      %vm361 = vweird.f32 %v355
      %vm362 = vweird.f32 %v356
      %vm363 = vmor %vm361, %vm362
      %v364 = vsel %vm363, %v356, %v360
      %v365 = vand.u32 2147483647, %v355
      %vm366 = vcmp.eq.f32.partialorder %v365, 8.507059e+37
      %v367 = vand.u32 %v355, 2147483648
      %v368 = vor.u32 1.1754944e-38, %v367
      %v369 = vsel %vm366, %v368, %v364
      %v370 = vmul.f32 1.0, %v369
      %v371 = vmul.f32 %v350, %v370
      %v372 = vld [vmem:[%s3] sm:$0xff]
      %v373 = vld [vmem:[%s3 + $0x8] sm:$0xff]
      %v374 = vld [vmem:[%s4] sm:$0x1]
      %vm375 = vcmask 130048
      %v377 = vsel %vm375, %v371, 0
      %379 = vmatpush.msra.mxu0 0.0
      %380 = vmatpush.msra.mxu0 0.0
      %381 = vmatpush.msra.mxu0 0.0
      %382 = vmatpush.msra.mxu0 0.0
      %383 = vmatpush.msra.mxu0 0.0
      %384 = vmatpush.msra.mxu0 0.0
      %385 = vmatpush.msra.mxu0 0.0
      %386 = vmatpush.msra.mxu0 0.0
      %387 = vmatpush.msra.mxu0 0.0
      %388 = vmatpush.msra.mxu0 0.0
      %389 = vmatpush.msra.mxu0 0.0
      %390 = vmatpush.msra.mxu0 0.0
      %391 = vmatpush.msra.mxu0 0.0
      %392 = vmatpush.msra.mxu0 0.0
      %393 = vmatpush.msra.mxu0 %v373
      %394 = vmatpush.msra.mxu0 %v372
      %395 = vmatmul.f32.gmra.mxu0 %v377
      %v396 = vpop.f32.mrf.mxu0
      %v397 = vadd.f32 %v374, %v396
      %398 = vdwg.mxu0
      %v399 = vxor.u32 %v397, 2147483648
      %v400 = vmul.f32 %v399, 1.442695
      %v401 = vpow.pop %v400
      %v402 = vadd.f32 %v401, 1.0
      %v403 = vrcp.pop %v402
      %v404 = vmul.f32 %v402, %v403
      %v405 = vsub.f32 1.0, %v404
      %v406 = vmul.f32 %v403, %v405
      %v407 = vadd.f32 %v403, %v406
      %vm408 = vweird.f32 %v402
      %vm409 = vweird.f32 %v403
      %vm410 = vmor %vm408, %vm409
      %v411 = vsel %vm410, %v403, %v407
      %v412 = vand.u32 2147483647, %v402
      %vm413 = vcmp.eq.f32.partialorder %v412, 8.507059e+37
      %v414 = vand.u32 %v402, 2147483648
      %v415 = vor.u32 1.1754944e-38, %v414
      %v416 = vsel %vm413, %v415, %v411
      %v417 = vmul.f32 1.0, %v416
      %v418 = vperm.slane %v417, 0
      %v419 = vlaneseq
      %v420 = vshrl.u32 %v419, 7
      %422 = vset.pattern.permute.xlu0 %v420
      %423 = vperm.xlu0 %422, %v418
      %v424 = vpop.permute.xlu0 %423
      %v425 = vlaneseq
      %v426 = vshrl.u32 %v425, 7
      %v427 = vadd.s32 %v426, 8
      %428 = vset.pattern.permute.xlu0 %v427
      %429 = vperm.xlu0 %428, %v418
      %v430 = vpop.permute.xlu0 %429
      %v431 = vlaneseq
      %v432 = vshrl.u32 %v431, 7
      %v433 = vadd.s32 %v432, 16
      %434 = vset.pattern.permute.xlu0 %v433
      %435 = vperm.xlu0 %434, %v418
      %v436 = vpop.permute.xlu0 %435
      %v437 = vlaneseq
      %v438 = vshrl.u32 %v437, 7
      %v439 = vadd.s32 %v438, 24
      %440 = vset.pattern.permute.xlu0 %v439
      %441 = vperm.xlu0 %440, %v418
      %v442 = vpop.permute.xlu0 %441
      %v443 = vlaneseq
      %v444 = vshrl.u32 %v443, 7
      %v445 = vadd.s32 %v444, 32
      %446 = vset.pattern.permute.xlu0 %v445
      %447 = vperm.xlu0 %446, %v418
      %v448 = vpop.permute.xlu0 %447
      %v449 = vlaneseq
      %v450 = vshrl.u32 %v449, 7
      %v451 = vadd.s32 %v450, 40
      %452 = vset.pattern.permute.xlu0 %v451
      %453 = vperm.xlu0 %452, %v418
      %v454 = vpop.permute.xlu0 %453
      %v455 = vlaneseq
      %v456 = vshrl.u32 %v455, 7
      %v457 = vadd.s32 %v456, 48
      %458 = vset.pattern.permute.xlu0 %v457
      %459 = vperm.xlu0 %458, %v418
      %v460 = vpop.permute.xlu0 %459
      %v461 = vlaneseq
      %v462 = vshrl.u32 %v461, 7
      %v463 = vadd.s32 %v462, 56
      %464 = vset.pattern.permute.xlu0 %v463
      %465 = vperm.xlu0 %464, %v418
      %v466 = vpop.permute.xlu0 %465
      %v467 = vmul.f32 %v233, %v424
      %v468 = vmul.f32 %v234, %v424
      %v469 = vmul.f32 %v235, %v430
      %v470 = vmul.f32 %v236, %v430
      %v471 = vmul.f32 %v237, %v436
      %v472 = vmul.f32 %v238, %v436
      %v473 = vmul.f32 %v239, %v442
      %v474 = vmul.f32 %v240, %v442
      %v475 = vmul.f32 %v241, %v448
      %v476 = vmul.f32 %v242, %v448
      %v477 = vmul.f32 %v243, %v454
      %v478 = vmul.f32 %v244, %v454
      %v479 = vmul.f32 %v245, %v460
      %v480 = vmul.f32 %v246, %v460
      %v481 = vmul.f32 %v247, %v466
      %v482 = vmul.f32 %v248, %v466
      %v483 = vpack.c.bf16 %v468, %v467
      %v484 = vpack.c.bf16 %v470, %v469
      %v485 = vpack.c.bf16 %v472, %v471
      %v486 = vpack.c.bf16 %v474, %v473
      %v487 = vpack.c.bf16 %v476, %v475
      %v488 = vpack.c.bf16 %v478, %v477
      %v489 = vpack.c.bf16 %v480, %v479
      %v490 = vpack.c.bf16 %v482, %v481
      %491 = vst [vmem:[%s224] sm:$0xff] %v483
      %492 = vst [vmem:[%s224 + $0x8] sm:$0xff] %v484
      %493 = vst [vmem:[%s224 + $0x10] sm:$0xff] %v485
      %494 = vst [vmem:[%s224 + $0x18] sm:$0xff] %v486
      %495 = vst [vmem:[%s224 + $0x20] sm:$0xff] %v487
      %496 = vst [vmem:[%s224 + $0x28] sm:$0xff] %v488
      %497 = vst [vmem:[%s224 + $0x30] sm:$0xff] %v489
      %498 = vst [vmem:[%s224 + $0x38] sm:$0xff] %v490
      %p499 = scmp.lt.s32.totalorder %s16, 1
      %s500 = scalar_select %p499, %s16, 1
      %s501 = smul.addr %s500, 16
      %s502 = smul.addr %s501, 4
      %s503 = scalar_lea.vmem %s5, %s502
      // Predicated region
      $region41: #{squeeze_excitation.1} parent=39 // pred_check
        %p504 = pneg %p144
      $region42: #{squeeze_excitation.1} parent=39 // pred_check_branch
        %506 = sbr.rel (%p504) target = $region44
      $region43: #{squeeze_excitation.1} parent=39 // pred_region
        _
      $region44: #{squeeze_excitation.1} parent=39 // pred_fallthru
        _
    $region40: #{squeeze_excitation.1} parent=5 // pred_fallthru
      _
    %p507 = scmp.le.s32.totalorder 2, %s11
    // Predicated region
    $region45: #{squeeze_excitation.1} parent=5 // pred_check
      %p508 = pneg %p507
    $region46: #{squeeze_excitation.1} parent=5 // pred_check_branch
      %510 = sbr.rel (%p508) target = $region48
    $region47: #{squeeze_excitation.1} parent=5 // pred_region
      %s511 = ssub.s32 %s11, 2
      // Predicated region
      $region49: #{squeeze_excitation.1} parent=47 // pred_check
        %p512 = pneg %p150
      $region50: #{squeeze_excitation.1} parent=47 // pred_check_branch
        %514 = sbr.rel (%p512) target = $region52
      $region51: #{squeeze_excitation.1} parent=47 // pred_region
        %p515 = scmp.lt.s32.totalorder %s17, 1
        %s516 = scalar_select %p515, %s17, 1
        %s517 = smul.addr %s516, 16
        %s518 = smul.addr %s517, 4
        %s519 = scalar_lea.vmem %s5, %s518
      $region52: #{squeeze_excitation.1} parent=47 // pred_fallthru
        _
    $region48: #{squeeze_excitation.1} parent=5 // pred_fallthru
      _
  $region6: #{squeeze_excitation.1} parent=0 // loop_footer
    %s15 = sadd.s32 1, %s11
  $region7: #{squeeze_excitation.1} parent=0 // loop_footer_branch
    %10 = sbr.rel target = $region3
  $region8: #{squeeze_excitation.1} parent=0 // loop_exit
    _

</llo_original>
